<compile_context>
chip_gen: v6e
topology: v6e:2x2x1
jax: 0.10.0
libtpu: 0.0.40
codegen_flags: <defaults>
</compile_context>

<pallas_src>
import functools
import math

import jax
import jax.numpy as jnp
from jax import lax
from jax.experimental import pallas as pl
from jax.experimental.pallas import tpu as pltpu

LANES = 128      # TPU vreg lane width
SUBLANES = 8     # TPU vreg sublane count (f32)
HIDDEN = 24      # Net hidden width (fc1 / fc2 outputs)
MAX_TILE = 512   # max batch rows per grid step


def _round_up(n, m):
    return (n + m - 1) // m * m


def _cdiv(a, b):
    return -(-a // b)


def _param_layout(input_size, output_size, hidden=HIDDEN):
    """Row offsets of each parameter segment inside the packed (rows,128) blob.

    Every segment starts on an 8-row (sublane-tile) boundary so the in-kernel
    ref slices are layout-aligned.  w2 / w3 are full 128-row blocks so the
    (tb,128) activations can be fed straight to the MXU."""
    kp = _round_up(max(input_size, 1), SUBLANES)   # K-padded fc1 contraction depth
    w1 = 0
    b1 = w1 + kp
    w2 = b1 + SUBLANES
    b2 = w2 + LANES
    w3 = b2 + SUBLANES
    b3 = w3 + LANES
    rows = b3 + SUBLANES
    return dict(kp=kp, w1=w1, b1=b1, w2=w2, b2=b2, w3=w3, b3=b3, rows=rows)


def pack_params(params, input_size, output_size, hidden=HIDDEN):
    """Pack the six PyTorch-layout tensors (w: (out,in), b: (out,)) into ONE
    (rows,128) f32 blob -> a single kernel operand / single DMA per call.

    NOTE (correctness-critical): the kernel relies on every unused row/lane of
    this blob being exactly 0.0 so that padded activation lanes stay 0 through
    both ReLUs and padded output lanes stay 0 before the bias add.  Do not
    change the zero-fill."""
    w1, b1, w2, b2, w3, b3 = params
    lay = _param_layout(input_size, output_size, hidden)
    blob = jnp.zeros((lay["rows"], LANES), jnp.float32)
    # fc1 stored as (kp, 128): row k = weights from input feature k (x @ this = fc1).
    blob = blob.at[lay["w1"]:lay["w1"] + input_size, :hidden].set(
        jnp.asarray(w1, jnp.float32).T)
    blob = blob.at[lay["b1"], :hidden].set(jnp.asarray(b1, jnp.float32))
    # fc2 stored as zero-padded (128,128): h1(tb,128) @ w2_pad on the MXU.
    blob = blob.at[lay["w2"]:lay["w2"] + hidden, :hidden].set(
        jnp.asarray(w2, jnp.float32).T)
    blob = blob.at[lay["b2"], :hidden].set(jnp.asarray(b2, jnp.float32))
    # fc3 stored TRANSPOSED as zero-padded (128,128): h2(tb,128) @ w3_pad on the MXU.
    blob = blob.at[lay["w3"]:lay["w3"] + hidden, :output_size].set(
        jnp.asarray(w3, jnp.float32).T)
    blob = blob.at[lay["b3"], :output_size].set(jnp.asarray(b3, jnp.float32))
    return blob


def _make_kernel(input_size, output_size, lay):
    kp = lay["kp"]
    w1, b1, w2, b2, w3, b3 = (lay["w1"], lay["b1"], lay["w2"],
                              lay["b2"], lay["w3"], lay["b3"])
    out_cols = output_size + 1          # Q-values + fused greedy-action lane

    def kernel(x_ref, p_ref, o_ref):
        x = x_ref[...]                  # (tb, kp) f32; lanes >= input_size are 0

        # ---- fc1 (input_size -> 24): MXU dot, K padded to kp (<=8) ----
        h = jnp.dot(x, p_ref[w1:w1 + kp, :], preferred_element_type=jnp.float32)
        h = jnp.maximum(h + p_ref[b1:b1 + 1, :], 0.0)     # lanes >= HIDDEN stay 0

        # ---- fc2 (24 -> 24): MXU dot against the zero-padded (128,128) block ----
        h = jnp.dot(h, p_ref[w2:w2 + LANES, :], preferred_element_type=jnp.float32)
        h = jnp.maximum(h + p_ref[b2:b2 + 1, :], 0.0)     # lanes >= HIDDEN stay 0

        # ---- fc3 (24 -> output_size): MXU dot against the transposed block ----
        q = jnp.dot(h, p_ref[w3:w3 + LANES, :], preferred_element_type=jnp.float32)
        q = q + p_ref[b3:b3 + 1, :]                       # lanes >= output_size stay 0

        # ---- fused downstream consumer: greedy action = argmax over valid lanes.
        # Two XLU tree reductions; small next to the 3 MXU pushes above.
        lane = lax.broadcasted_iota(jnp.int32, q.shape, 1)
        qm = jnp.where(lane < output_size, q, -jnp.inf)
        qmax = jnp.max(qm, axis=-1, keepdims=True)
        idxf = jnp.min(jnp.where(qm == qmax, lane.astype(jnp.float32),
                                 jnp.float32(LANES)), axis=-1, keepdims=True)

        # Fold the action index into lane `output_size` of the q slab and write
        # back only the valid columns (narrow store -> 12 B/row HBM writeback).
        out = jnp.where(lane == output_size, idxf, q)
        o_ref[...] = out[:, :out_cols]

    return kernel


def net_forward(x, packed, *, input_size, output_size):
    """Forward pass of Net on a batch of states.

    Returns (q_values (batch, output_size) f32, greedy_action (batch,) int32)."""
    batch = x.shape[0]
    lay = _param_layout(input_size, output_size)
    kp = lay["kp"]
    out_cols = output_size + 1
    assert packed.shape == (lay["rows"], LANES)

    # Batch tiling: >= 2 tiles whenever possible (v7x megacore sharding), tile
    # rows a multiple of 8, and at most 8 * n_tiles padding rows ever computed.
    b_pad0 = _round_up(batch, SUBLANES)
    n_tiles = max(_cdiv(b_pad0, MAX_TILE), 2 if b_pad0 >= 2 * SUBLANES else 1)
    tb = _round_up(_cdiv(b_pad0, n_tiles), SUBLANES)
    b_pad = n_tiles * tb

    # Narrow (batch_pad, kp) input: 32 B/row instead of the old 512 B/row slab.
    x_pad = jnp.zeros((b_pad, kp), jnp.float32)
    x_pad = x_pad.at[:batch, :input_size].set(x.astype(jnp.float32))

    kernel = _make_kernel(input_size, output_size, lay)
    flops = 2 * b_pad * (kp * HIDDEN + HIDDEN * HIDDEN + HIDDEN * output_size)
    bytes_accessed = (x_pad.size + packed.size + b_pad * out_cols) * 4

    out = pl.pallas_call(
        kernel,
        out_shape=jax.ShapeDtypeStruct((b_pad, out_cols), jnp.float32),
        grid_spec=pltpu.PrefetchScalarGridSpec(
            num_scalar_prefetch=0,
            grid=(n_tiles,),
            in_specs=[pl.BlockSpec((tb, kp), lambda i: (i, 0)),            # states
                      pl.BlockSpec((lay["rows"], LANES), lambda i: (0, 0))],  # packed params
            out_specs=pl.BlockSpec((tb, out_cols), lambda i: (i, 0)),      # Q + action
        ),
        compiler_params=pltpu.CompilerParams(dimension_semantics=("parallel",)),
        cost_estimate=pl.CostEstimate(flops=flops, transcendentals=0,
                                      bytes_accessed=bytes_accessed),
    )(x_pad, packed)

    q = out[:batch, :output_size]
    greedy = out[:batch, output_size].astype(jnp.int32)
    return q, greedy


def init_params(key, input_size, output_size, hidden=HIDDEN):
    """Deterministic PyTorch-style init. Weights in torch layout (out, in)."""
    dims = [(input_size, hidden), (hidden, hidden), (hidden, output_size)]
    params = []
    for fan_in, fan_out in dims:
        key, kw, kb = jax.random.split(key, 3)
        bound = 1.0 / math.sqrt(fan_in)
        w = jax.random.uniform(kw, (fan_out, fan_in), jnp.float32, -bound, bound)
        b = jax.random.uniform(kb, (fan_out,), jnp.float32, -bound, bound)
        params += [w, b]
    return tuple(params)


def _reference_forward(x, params):
    w1, b1, w2, b2, w3, b3 = params
    h = jnp.maximum(x @ w1.T + b1, 0.0)
    h = jnp.maximum(h @ w2.T + b2, 0.0)
    return h @ w3.T + b3


if __name__ == "__main__":
    # CartPole-like shapes: state dim 4, 2 actions, small batch.
    input_size, output_size, batch = 4, 2, 8

    key = jax.random.PRNGKey(0)
    k_x, k_p = jax.random.split(key)
    params = init_params(k_p, input_size, output_size)
    packed = pack_params(params, input_size, output_size)   # packed once, reused per step
    x = jax.random.normal(k_x, (batch, input_size), dtype=jnp.float32)

    fwd = jax.jit(functools.partial(net_forward, input_size=input_size,
                                    output_size=output_size))
    q, greedy = fwd(x, packed)
    jax.block_until_ready((q, greedy))

    # Sanity-check against a plain-JAX reference of the same math.
    ref_q = _reference_forward(x, params)
    assert q.shape == (batch, output_size)
    assert greedy.shape == (batch,)
    assert jnp.allclose(q, ref_q, atol=1e-4, rtol=1e-4)
    assert jnp.array_equal(greedy, jnp.argmax(ref_q, axis=-1))

    # TODO(synk): Adam optimizer, MSELoss and .to(device) are training/host-side
    # state with no forward-pass Pallas equivalent; intentionally not translated.
    print("KERNEL_OK")
</pallas_src>

<mosaic_0001>
module attributes {stable_mosaic.version = 11 : i64} {
  func.func @kernel(%arg0: i32, %arg1: memref<8x8xf32, #tpu.memory_space<vmem>>, %arg2: memref<288x128xf32, #tpu.memory_space<vmem>>, %arg3: memref<8x3xf32, #tpu.memory_space<vmem>>) attributes {dimension_semantics = [#tpu.dimension_semantics<parallel>], iteration_bounds = array<i64: 1>, scalar_prefetch = 0 : i64, scratch_operands = 0 : i64, tpu.core_type = #tpu.core_type<tc>, window_params = [{transform_indices = @transform_0, window_bounds = array<i64: 8, 8>}, {pipeline_mode = #tpu.pipeline_mode<synchronous>, transform_indices = @transform_1, window_bounds = array<i64: 288, 128>}, {transform_indices = @transform_2, window_bounds = array<i64: 8, 3>}]} {
    %c0 = arith.constant 0 : index
    %c0_0 = arith.constant 0 : index
    %0 = vector.load %arg1[%c0, %c0_0] : memref<8x8xf32, #tpu.memory_space<vmem>>, vector<8x8xf32>
    %c0_1 = arith.constant 0 : index
    %c0_2 = arith.constant 0 : index
    %1 = vector.load %arg2[%c0_1, %c0_2] : memref<288x128xf32, #tpu.memory_space<vmem>>, vector<8x128xf32>
    %cst = arith.constant dense<0.000000e+00> : vector<8x128xf32>
    %2 = tpu.matmul %0, %1, %cst {dimension_numbers = #tpu.dot_dimension_numbers<[1], [0], [0], [1], [0, 0, 1, 1], [], []>} : vector<8x8xf32>, vector<8x128xf32>, vector<8x128xf32> -> vector<8x128xf32>
    %c8 = arith.constant 8 : index
    %c0_3 = arith.constant 0 : index
    %3 = vector.load %arg2[%c8, %c0_3] : memref<288x128xf32, #tpu.memory_space<vmem>>, vector<1x128xf32>
    %4 = vector.broadcast %3 : vector<1x128xf32> to vector<8x128xf32>
    %5 = arith.addf %2, %4 : vector<8x128xf32>
    %cst_4 = arith.constant 0.000000e+00 : f32
    %6 = vector.broadcast %cst_4 : f32 to vector<8x128xf32>
    %7 = arith.maximumf %5, %6 : vector<8x128xf32>
    %c16 = arith.constant 16 : index
    %c0_5 = arith.constant 0 : index
    %8 = vector.load %arg2[%c16, %c0_5] : memref<288x128xf32, #tpu.memory_space<vmem>>, vector<128x128xf32>
    %cst_6 = arith.constant dense<0.000000e+00> : vector<8x128xf32>
    %9 = tpu.matmul %7, %8, %cst_6 {dimension_numbers = #tpu.dot_dimension_numbers<[1], [0], [0], [1], [0, 0, 1, 1], [], []>} : vector<8x128xf32>, vector<128x128xf32>, vector<8x128xf32> -> vector<8x128xf32>
    %c144 = arith.constant 144 : index
    %c0_7 = arith.constant 0 : index
    %10 = vector.load %arg2[%c144, %c0_7] : memref<288x128xf32, #tpu.memory_space<vmem>>, vector<1x128xf32>
    %11 = vector.broadcast %10 : vector<1x128xf32> to vector<8x128xf32>
    %12 = arith.addf %9, %11 : vector<8x128xf32>
    %cst_8 = arith.constant 0.000000e+00 : f32
    %13 = vector.broadcast %cst_8 : f32 to vector<8x128xf32>
    %14 = arith.maximumf %12, %13 : vector<8x128xf32>
    %c152 = arith.constant 152 : index
    %c0_9 = arith.constant 0 : index
    %15 = vector.load %arg2[%c152, %c0_9] : memref<288x128xf32, #tpu.memory_space<vmem>>, vector<128x128xf32>
    %cst_10 = arith.constant dense<0.000000e+00> : vector<8x128xf32>
    %16 = tpu.matmul %14, %15, %cst_10 {dimension_numbers = #tpu.dot_dimension_numbers<[1], [0], [0], [1], [0, 0, 1, 1], [], []>} : vector<8x128xf32>, vector<128x128xf32>, vector<8x128xf32> -> vector<8x128xf32>
    %c280 = arith.constant 280 : index
    %c0_11 = arith.constant 0 : index
    %17 = vector.load %arg2[%c280, %c0_11] : memref<288x128xf32, #tpu.memory_space<vmem>>, vector<1x128xf32>
    %18 = vector.broadcast %17 : vector<1x128xf32> to vector<8x128xf32>
    %19 = arith.addf %16, %18 : vector<8x128xf32>
    %20 = tpu.iota {dimensions = array<i32: 1>} : vector<8x128xi32>
    %c2_i32 = arith.constant 2 : i32
    %21 = vector.broadcast %c2_i32 : i32 to vector<8x128xi32>
    %22 = arith.cmpi slt, %20, %21 : vector<8x128xi32>
    %cst_12 = arith.constant 0xFF800000 : f32
    %23 = vector.broadcast %cst_12 : f32 to vector<8x128xf32>
    %24 = arith.select %22, %19, %23 : vector<8x128xi1>, vector<8x128xf32>
    %cst_13 = arith.constant dense<0xFF800000> : vector<8xf32>
    %25 = vector.multi_reduction <maximumf>, %24, %cst_13 [1] : vector<8x128xf32> to vector<8xf32>
    %26 = vector.shape_cast %25 : vector<8xf32> to vector<8x1xf32>
    %27 = vector.broadcast %26 : vector<8x1xf32> to vector<8x128xf32>
    %28 = arith.cmpf oeq, %24, %27 : vector<8x128xf32>
    %29 = arith.sitofp %20 : vector<8x128xi32> to vector<8x128xf32>
    %cst_14 = arith.constant 1.280000e+02 : f32
    %30 = vector.broadcast %cst_14 : f32 to vector<8x128xf32>
    %31 = arith.select %28, %29, %30 : vector<8x128xi1>, vector<8x128xf32>
    %cst_15 = arith.constant dense<0x7F800000> : vector<8xf32>
    %32 = vector.multi_reduction <minimumf>, %31, %cst_15 [1] : vector<8x128xf32> to vector<8xf32>
    %33 = vector.shape_cast %32 : vector<8xf32> to vector<8x1xf32>
    %c2_i32_16 = arith.constant 2 : i32
    %34 = vector.broadcast %c2_i32_16 : i32 to vector<8x128xi32>
    %35 = arith.cmpi eq, %20, %34 : vector<8x128xi32>
    %36 = vector.shape_cast %33 : vector<8x1xf32> to vector<8x1xf32>
    %37 = vector.broadcast %36 : vector<8x1xf32> to vector<8x128xf32>
    %38 = arith.select %35, %37, %19 : vector<8x128xi1>, vector<8x128xf32>
    %39 = vector.extract_strided_slice %38 {offsets = [0, 0], sizes = [8, 3], strides = [1, 1]} : vector<8x128xf32> to vector<8x3xf32>
    %c0_17 = arith.constant 0 : index
    %c0_18 = arith.constant 0 : index
    %40 = vector.load %arg3[%c0_17, %c0_18] : memref<8x3xf32, #tpu.memory_space<vmem>>, vector<8x3xf32>
    tpu.vector_store %arg3[%c0_17, %c0_18], %39 {strides = array<i32>} : memref<8x3xf32, #tpu.memory_space<vmem>>, vector<8x3xf32>,
    return
  }
  func.func @transform_0(%arg0: i32) -> (i32, i32) {
    %c0_i32 = arith.constant 0 : i32
    %c0_i32_0 = arith.constant 0 : i32
    return %arg0, %c0_i32 : i32, i32
  }
  func.func @transform_1(%arg0: i32) -> (i32, i32) {
    %c0_i32 = arith.constant 0 : i32
    %c0_i32_0 = arith.constant 0 : i32
    %c0_i32_1 = arith.constant 0 : i32
    return %c0_i32, %c0_i32_0 : i32, i32
  }
  func.func @transform_2(%arg0: i32) -> (i32, i32) {
    %c0_i32 = arith.constant 0 : i32
    %c0_i32_0 = arith.constant 0 : i32
    return %arg0, %c0_i32 : i32, i32
  }
}

</mosaic_0001>

<llo_original>
// kernel: net_forward.1
$region0: #{net_forward.1}
  #allocation0 [shape = 'u32[]', space=smem, size = 0x4, offset = 0x4, fixed_abs, tag = 'smem constant byte address 0x4 - core index']
  #allocation1 [shape = 'u32[144,128]{1,0:T(1,128)}', space=vmem, size = 0x12000, scoped, tag = 'internal scratch']
  %s0 = inlined_call_operand.vmem [shape: f32[8,8], index: 0, kind: input, shape index: {}]
  %s1 = inlined_call_operand.hbm [shape: f32[288,128], index: 1, kind: input, shape index: {}]
  %s2 = inlined_call_operand.vmem [shape: f32[8,3], index: 2, kind: output, shape index: {}]
  %s3 = sld [smem:[#allocation0]]
  $region22: #{net_forward.1} parent=0
    _
  %s5 = ssub.s32 1, %s3
  %s6 = scalar_select 0, %s5, %s3
  $region1: #{net_forward.1} parent=0
    #allocation2 [shape = 'u8[147456]{0}', space=vmem, size = 0x24000, scoped, tag = 'input window, operand 1, single buffered']
    #allocation3 [shape = 's32[1]{0}', space=sflag, size = 0x4, scoped, tag = 'scoped memory for net_forward.1']
    %7 = vsyncpa [#allocation3], 0
    // Predicated region
    $region2: #{net_forward.1} parent=1 // pred_check
      _
    $region3: #{net_forward.1} parent=1 // pred_check_branch
      %9 = sbr.rel (0) target = $region5
    $region4: #{net_forward.1} parent=1 // pred_region
      _
    $region5: #{net_forward.1} parent=1 // pred_fallthru
      _
    // Predicated region
    $region6: #{net_forward.1} parent=1 // pred_check
      _
    $region7: #{net_forward.1} parent=1 // pred_check_branch
      %11 = sbr.rel (0) target = $region9
    $region8: #{net_forward.1} parent=1 // pred_region
      %s13 = ssub.s32 4608, 4608
      %14 = vsyncadd [#allocation3], %s13
      %s15 = sshll.u32 [#allocation2], 4
      %s16 = int_to_ptr.vmem [resolvable:$true] %s15
      %21 = dma.hbm_to_vmem [thread:$0]  %s1, 4608, %s16, [#allocation3], 128, 128, 8
    $region9: #{net_forward.1} parent=1 // pred_fallthru
      _
    // Predicated region
    $region10: #{net_forward.1} parent=1 // pred_check
      _
    $region11: #{net_forward.1} parent=1 // pred_check_branch
      %23 = sbr.rel (0) target = $region13
    $region12: #{net_forward.1} parent=1 // pred_region
      %24 = dma.done [#allocation3], 4608
    $region13: #{net_forward.1} parent=1 // pred_fallthru
      _
    %v25 = vld [vmem:[%s0] sm:$0xff]
    %v26 = vld [vmem:[#allocation2] sm:$0xff]
    %v27 = vld [vmem:[#allocation2 + $0x8] sm:$0x1]
    %v28 = vlaneseq
    %v29 = vshrl.u32 %v28, 7
    %v30 = vsub.s32 0, %v29
    %v31 = vrot.slane %v27, %v30
    %vm32 = vcmask 64512
    %v34 = vsel %vm32, %v25, 0
    %36 = vmatprep.subr.mxu0 0.0
    %37 = vmatpush1.msra.mxu0 0.0
    %38 = vmatprep.subr.mxu0 0.0
    %39 = vmatpush1.msra.mxu0 0.0
    %40 = vmatprep.subr.mxu0 0.0
    %41 = vmatpush1.msra.mxu0 0.0
    %42 = vmatprep.subr.mxu0 0.0
    %43 = vmatpush1.msra.mxu0 0.0
    %44 = vmatprep.subr.mxu0 0.0
    %45 = vmatpush1.msra.mxu0 0.0
    %46 = vmatprep.subr.mxu0 0.0
    %47 = vmatpush1.msra.mxu0 0.0
    %48 = vmatprep.subr.mxu0 0.0
    %49 = vmatpush1.msra.mxu0 0.0
    %50 = vmatprep.subr.mxu0 0.0
    %51 = vmatpush1.msra.mxu0 0.0
    %52 = vmatprep.subr.mxu0 0.0
    %53 = vmatpush1.msra.mxu0 0.0
    %54 = vmatprep.subr.mxu0 0.0
    %55 = vmatpush1.msra.mxu0 0.0
    %56 = vmatprep.subr.mxu0 0.0
    %57 = vmatpush1.msra.mxu0 0.0
    %58 = vmatprep.subr.mxu0 0.0
    %59 = vmatpush1.msra.mxu0 0.0
    %60 = vmatprep.subr.mxu0 0.0
    %61 = vmatpush1.msra.mxu0 0.0
    %62 = vmatprep.subr.mxu0 0.0
    %63 = vmatpush1.msra.mxu0 0.0
    %64 = vmatprep.subr.mxu0 0.0
    %65 = vmatpush1.msra.mxu0 0.0
    %66 = vmatprep.subr.mxu0 0.0
    %67 = vmatpush1.msra.mxu0 %v26
    %68 = vmatprep.subr.mxu0 0.0
    %69 = vmatpush2.msra.mxu0 0.0
    %70 = vmatprep.subr.mxu0 0.0
    %71 = vmatpush2.msra.mxu0 0.0
    %72 = vmatprep.subr.mxu0 0.0
    %73 = vmatpush2.msra.mxu0 0.0
    %74 = vmatprep.subr.mxu0 0.0
    %75 = vmatpush2.msra.mxu0 0.0
    %76 = vmatprep.subr.mxu0 0.0
    %77 = vmatpush2.msra.mxu0 0.0
    %78 = vmatprep.subr.mxu0 0.0
    %79 = vmatpush2.msra.mxu0 0.0
    %80 = vmatprep.subr.mxu0 0.0
    %81 = vmatpush2.msra.mxu0 0.0
    %82 = vmatprep.subr.mxu0 0.0
    %83 = vmatpush2.msra.mxu0 0.0
    %84 = vmatprep.subr.mxu0 0.0
    %85 = vmatpush2.msra.mxu0 0.0
    %86 = vmatprep.subr.mxu0 0.0
    %87 = vmatpush2.msra.mxu0 0.0
    %88 = vmatprep.subr.mxu0 0.0
    %89 = vmatpush2.msra.mxu0 0.0
    %90 = vmatprep.subr.mxu0 0.0
    %91 = vmatpush2.msra.mxu0 0.0
    %92 = vmatprep.subr.mxu0 0.0
    %93 = vmatpush2.msra.mxu0 0.0
    %94 = vmatprep.subr.mxu0 0.0
    %95 = vmatpush2.msra.mxu0 0.0
    %96 = vmatprep.subr.mxu0 0.0
    %97 = vmatpush2.msra.mxu0 0.0
    %98 = vmatprep.subr.mxu0 0.0
    %99 = vmatpush2.msra.mxu0 0.0
    %100 = vmatprep.mubr.f32.mxu0 0.0
    %101 = vmatmul.mubr.f32.gmra.mxu0 %v34
    %v102 = vpop.f32.mrf.mxu0
    %v103 = vadd.f32 %v31, %v102
    %v104 = vpop.f32.mrf.mxu0
    %105 = vdwg.mxu0
    %v106 = vmax.f32 %v103, 0.0
    %v107 = vld [vmem:[#allocation2 + $0x10] sm:$0xff]
    %v108 = vld [vmem:[#allocation2 + $0x18] sm:$0xff]
    %v109 = vld [vmem:[#allocation2 + $0x20] sm:$0xff]
    %v110 = vld [vmem:[#allocation2 + $0x28] sm:$0xff]
    %v111 = vld [vmem:[#allocation2 + $0x30] sm:$0xff]
    %v112 = vld [vmem:[#allocation2 + $0x38] sm:$0xff]
    %v113 = vld [vmem:[#allocation2 + $0x40] sm:$0xff]
    %v114 = vld [vmem:[#allocation2 + $0x48] sm:$0xff]
    %v115 = vld [vmem:[#allocation2 + $0x50] sm:$0xff]
    %v116 = vld [vmem:[#allocation2 + $0x58] sm:$0xff]
    %v117 = vld [vmem:[#allocation2 + $0x60] sm:$0xff]
    %v118 = vld [vmem:[#allocation2 + $0x68] sm:$0xff]
    %v119 = vld [vmem:[#allocation2 + $0x70] sm:$0xff]
    %v120 = vld [vmem:[#allocation2 + $0x78] sm:$0xff]
    %v121 = vld [vmem:[#allocation2 + $0x80] sm:$0xff]
    %v122 = vld [vmem:[#allocation2 + $0x88] sm:$0xff]
    %v123 = vld [vmem:[#allocation2 + $0x90] sm:$0x1]
    %v124 = vlaneseq
    %v125 = vshrl.u32 %v124, 7
    %v126 = vsub.s32 0, %v125
    %v127 = vrot.slane %v123, %v126
    %128 = vmatprep.subr.mxu0 0.0
    %129 = vmatpush1.msra.mxu0 %v122
    %130 = vmatprep.subr.mxu0 0.0
    %131 = vmatpush1.msra.mxu0 %v121
    %132 = vmatprep.subr.mxu0 0.0
    %133 = vmatpush1.msra.mxu0 %v120
    %134 = vmatprep.subr.mxu0 0.0
    %135 = vmatpush1.msra.mxu0 %v119
    %136 = vmatprep.subr.mxu0 0.0
    %137 = vmatpush1.msra.mxu0 %v118
    %138 = vmatprep.subr.mxu0 0.0
    %139 = vmatpush1.msra.mxu0 %v117
    %140 = vmatprep.subr.mxu0 0.0
    %141 = vmatpush1.msra.mxu0 %v116
    %142 = vmatprep.subr.mxu0 0.0
    %143 = vmatpush1.msra.mxu0 %v115
    %144 = vmatprep.subr.mxu0 0.0
    %145 = vmatpush1.msra.mxu0 %v114
    %146 = vmatprep.subr.mxu0 0.0
    %147 = vmatpush1.msra.mxu0 %v113
    %148 = vmatprep.subr.mxu0 0.0
    %149 = vmatpush1.msra.mxu0 %v112
    %150 = vmatprep.subr.mxu0 0.0
    %151 = vmatpush1.msra.mxu0 %v111
    %152 = vmatprep.subr.mxu0 0.0
    %153 = vmatpush1.msra.mxu0 %v110
    %154 = vmatprep.subr.mxu0 0.0
    %155 = vmatpush1.msra.mxu0 %v109
    %156 = vmatprep.subr.mxu0 0.0
    %157 = vmatpush1.msra.mxu0 %v108
    %158 = vmatprep.subr.mxu0 0.0
    %159 = vmatpush1.msra.mxu0 %v107
    %160 = vmatprep.subr.mxu0 0.0
    %161 = vmatpush2.msra.mxu0 0.0
    %162 = vmatprep.subr.mxu0 0.0
    %163 = vmatpush2.msra.mxu0 0.0
    %164 = vmatprep.subr.mxu0 0.0
    %165 = vmatpush2.msra.mxu0 0.0
    %166 = vmatprep.subr.mxu0 0.0
    %167 = vmatpush2.msra.mxu0 0.0
    %168 = vmatprep.subr.mxu0 0.0
    %169 = vmatpush2.msra.mxu0 0.0
    %170 = vmatprep.subr.mxu0 0.0
    %171 = vmatpush2.msra.mxu0 0.0
    %172 = vmatprep.subr.mxu0 0.0
    %173 = vmatpush2.msra.mxu0 0.0
    %174 = vmatprep.subr.mxu0 0.0
    %175 = vmatpush2.msra.mxu0 0.0
    %176 = vmatprep.subr.mxu0 0.0
    %177 = vmatpush2.msra.mxu0 0.0
    %178 = vmatprep.subr.mxu0 0.0
    %179 = vmatpush2.msra.mxu0 0.0
    %180 = vmatprep.subr.mxu0 0.0
    %181 = vmatpush2.msra.mxu0 0.0
    %182 = vmatprep.subr.mxu0 0.0
    %183 = vmatpush2.msra.mxu0 0.0
    %184 = vmatprep.subr.mxu0 0.0
    %185 = vmatpush2.msra.mxu0 0.0
    %186 = vmatprep.subr.mxu0 0.0
    %187 = vmatpush2.msra.mxu0 0.0
    %188 = vmatprep.subr.mxu0 0.0
    %189 = vmatpush2.msra.mxu0 0.0
    %190 = vmatprep.subr.mxu0 0.0
    %191 = vmatpush2.msra.mxu0 0.0
    %192 = vmatprep.mubr.f32.mxu0 0.0
    %193 = vmatmul.mubr.f32.gmra.mxu0 %v106
    %v194 = vpop.f32.mrf.mxu0
    %v195 = vadd.f32 %v127, %v194
    %v196 = vpop.f32.mrf.mxu0
    %197 = vdwg.mxu0
    %v198 = vmax.f32 %v195, 0.0
    %v199 = vld [vmem:[#allocation2 + $0x98] sm:$0xff]
    %v200 = vld [vmem:[#allocation2 + $0xa0] sm:$0xff]
    %v201 = vld [vmem:[#allocation2 + $0xa8] sm:$0xff]
    %v202 = vld [vmem:[#allocation2 + $0xb0] sm:$0xff]
    %v203 = vld [vmem:[#allocation2 + $0xb8] sm:$0xff]
    %v204 = vld [vmem:[#allocation2 + $0xc0] sm:$0xff]
    %v205 = vld [vmem:[#allocation2 + $0xc8] sm:$0xff]
    %v206 = vld [vmem:[#allocation2 + $0xd0] sm:$0xff]
    %v207 = vld [vmem:[#allocation2 + $0xd8] sm:$0xff]
    %v208 = vld [vmem:[#allocation2 + $0xe0] sm:$0xff]
    %v209 = vld [vmem:[#allocation2 + $0xe8] sm:$0xff]
    %v210 = vld [vmem:[#allocation2 + $0xf0] sm:$0xff]
    %v211 = vld [vmem:[#allocation2 + $0xf8] sm:$0xff]
    %v212 = vld [vmem:[#allocation2 + $0x100] sm:$0xff]
    %v213 = vld [vmem:[#allocation2 + $0x108] sm:$0xff]
    %v214 = vld [vmem:[#allocation2 + $0x110] sm:$0xff]
    %v215 = vld [vmem:[#allocation2 + $0x118] sm:$0x1]
    %v216 = vlaneseq
    %v217 = vshrl.u32 %v216, 7
    %v218 = vsub.s32 0, %v217
    %v219 = vrot.slane %v215, %v218
    %220 = vmatprep.subr.mxu0 0.0
    %221 = vmatpush1.msra.mxu0 %v214
    %222 = vmatprep.subr.mxu0 0.0
    %223 = vmatpush1.msra.mxu0 %v213
    %224 = vmatprep.subr.mxu0 0.0
    %225 = vmatpush1.msra.mxu0 %v212
    %226 = vmatprep.subr.mxu0 0.0
    %227 = vmatpush1.msra.mxu0 %v211
    %228 = vmatprep.subr.mxu0 0.0
    %229 = vmatpush1.msra.mxu0 %v210
    %230 = vmatprep.subr.mxu0 0.0
    %231 = vmatpush1.msra.mxu0 %v209
    %232 = vmatprep.subr.mxu0 0.0
    %233 = vmatpush1.msra.mxu0 %v208
    %234 = vmatprep.subr.mxu0 0.0
    %235 = vmatpush1.msra.mxu0 %v207
    %236 = vmatprep.subr.mxu0 0.0
    %237 = vmatpush1.msra.mxu0 %v206
    %238 = vmatprep.subr.mxu0 0.0
    %239 = vmatpush1.msra.mxu0 %v205
    %240 = vmatprep.subr.mxu0 0.0
    %241 = vmatpush1.msra.mxu0 %v204
    %242 = vmatprep.subr.mxu0 0.0
    %243 = vmatpush1.msra.mxu0 %v203
    %244 = vmatprep.subr.mxu0 0.0
    %245 = vmatpush1.msra.mxu0 %v202
    %246 = vmatprep.subr.mxu0 0.0
    %247 = vmatpush1.msra.mxu0 %v201
    %248 = vmatprep.subr.mxu0 0.0
    %249 = vmatpush1.msra.mxu0 %v200
    %250 = vmatprep.subr.mxu0 0.0
    %251 = vmatpush1.msra.mxu0 %v199
    %252 = vmatprep.subr.mxu0 0.0
    %253 = vmatpush2.msra.mxu0 0.0
    %254 = vmatprep.subr.mxu0 0.0
    %255 = vmatpush2.msra.mxu0 0.0
    %256 = vmatprep.subr.mxu0 0.0
    %257 = vmatpush2.msra.mxu0 0.0
    %258 = vmatprep.subr.mxu0 0.0
    %259 = vmatpush2.msra.mxu0 0.0
    %260 = vmatprep.subr.mxu0 0.0
    %261 = vmatpush2.msra.mxu0 0.0
    %262 = vmatprep.subr.mxu0 0.0
    %263 = vmatpush2.msra.mxu0 0.0
    %264 = vmatprep.subr.mxu0 0.0
    %265 = vmatpush2.msra.mxu0 0.0
    %266 = vmatprep.subr.mxu0 0.0
    %267 = vmatpush2.msra.mxu0 0.0
    %268 = vmatprep.subr.mxu0 0.0
    %269 = vmatpush2.msra.mxu0 0.0
    %270 = vmatprep.subr.mxu0 0.0
    %271 = vmatpush2.msra.mxu0 0.0
    %272 = vmatprep.subr.mxu0 0.0
    %273 = vmatpush2.msra.mxu0 0.0
    %274 = vmatprep.subr.mxu0 0.0
    %275 = vmatpush2.msra.mxu0 0.0
    %276 = vmatprep.subr.mxu0 0.0
    %277 = vmatpush2.msra.mxu0 0.0
    %278 = vmatprep.subr.mxu0 0.0
    %279 = vmatpush2.msra.mxu0 0.0
    %280 = vmatprep.subr.mxu0 0.0
    %281 = vmatpush2.msra.mxu0 0.0
    %282 = vmatprep.subr.mxu0 0.0
    %283 = vmatpush2.msra.mxu0 0.0
    %284 = vmatprep.mubr.f32.mxu0 0.0
    %285 = vmatmul.mubr.f32.gmra.mxu0 %v198
    %v286 = vpop.f32.mrf.mxu0
    %v287 = vadd.f32 %v219, %v286
    %v288 = vpop.f32.mrf.mxu0
    %289 = vdwg.mxu0
    %v290 = vlaneseq
    %v291 = vand.u32 %v290, 127
    %vm292 = vcmp.lt.s32.totalorder %v291, 2
    %v293 = vsel %vm292, %v287, -inf
    %294 = vmax.xlane.f32.xlu0 %v293
    %v295 = vpop.xlane.xlu0 %294
    %vm296 = vcmp.eq.f32.partialorder %v293, %v295
    %v297 = vcvt.s32.f32 %v291
    %v298 = vsel %vm296, %v297, 128.0
    %299 = vmin.xlane.f32.xlu0 %v298
    %v300 = vpop.xlane.xlu0 %299
    %vm301 = vcmp.eq.s32.totalorder %v291, 2
    %v302 = vsel %vm301, %v300, %v287
    %vm303 = vcmask 23552
    %304 = vst.msk [vmem:[%s2] sm:$0xff] %vm303, %v302
    // Predicated region
    $region14: #{net_forward.1} parent=1 // pred_check
      _
    $region15: #{net_forward.1} parent=1 // pred_check_branch
      %306 = sbr.rel (0) target = $region17
    $region16: #{net_forward.1} parent=1 // pred_region
      _
    $region17: #{net_forward.1} parent=1 // pred_fallthru
      _
    // Predicated region
    $region18: #{net_forward.1} parent=1 // pred_check
      _
    $region19: #{net_forward.1} parent=1 // pred_check_branch
      %308 = sbr.rel (0) target = $region21
    $region20: #{net_forward.1} parent=1 // pred_region
      _
    $region21: #{net_forward.1} parent=1 // pred_fallthru
      _
    %309 = vsyncpa [#allocation3], 1

</llo_original>
